<compile_context>
chip_gen: v7x
topology: tpu7x:2x2x1
jax: 0.10.0
libtpu: 0.0.40
codegen_flags: <defaults>
</compile_context>

<pallas_src>
import jax
import jax.numpy as jnp
from jax import lax
from jax.experimental import pallas as pl
from jax.experimental.pallas import tpu as pltpu

_LANES = 128


def _biencoder_kernel(emb_t_ref, mask_t_ref, emb_c_ref, mask_c_ref, out_ref,
                      acc_t_ref, den_t_ref, acc_c_ref, den_c_ref):
    k = pl.program_id(1)

    @pl.when(k == 0)
    def _init():
        acc_t_ref[...] = jnp.zeros_like(acc_t_ref)
        acc_c_ref[...] = jnp.zeros_like(acc_c_ref)
        den_t_ref[...] = jnp.zeros_like(den_t_ref)
        den_c_ref[...] = jnp.zeros_like(den_c_ref)

    def _accumulate(emb_ref, mask_ref, acc_ref, den_ref):
        m32 = mask_ref[...]                                   # (TB, TS) f32
        emb = emb_ref[...]                                    # (TB, TS, H) bf16
        # Multiply in the embedding dtype (exact: mask is 0/1), accumulate f32.
        masked = emb * m32.astype(emb.dtype)[:, :, None]
        acc_ref[...] += jnp.sum(masked.astype(jnp.float32), axis=1)
        den_ref[...] += jnp.sum(m32, axis=1, keepdims=True)

    _accumulate(emb_t_ref, mask_t_ref, acc_t_ref, den_t_ref)
    _accumulate(emb_c_ref, mask_c_ref, acc_c_ref, den_c_ref)

    @pl.when(k == pl.num_programs(1) - 1)
    def _finalize():
        def _pool_normalize(acc_ref, den_ref):
            # torch.clamp(mask.sum(1), min=1e-9) then divide (EUP reciprocal).
            inv_den = pl.reciprocal(jnp.maximum(den_ref[...], 1e-9), approx=False)
            pooled = acc_ref[...] * inv_den                   # (TB, H) f32
            # F.normalize(p=2, dim=1, eps=1e-12): x / max(||x||, 1e-12)
            ssq = jnp.sum(pooled * pooled, axis=1, keepdims=True)
            return pooled * lax.rsqrt(jnp.maximum(ssq, 1e-24))

        pt = _pool_normalize(acc_t_ref, den_t_ref)
        pc = _pool_normalize(acc_c_ref, den_c_ref)
        # pt / pc are unit-norm, so cosine similarity is just the dot product
        # (the eps=1e-8 norm clamp of cosine_similarity is inactive).
        cos = jnp.sum(pt * pc, axis=1, keepdims=True)         # (TB, 1)
        cos = jnp.maximum(cos, 1e-20)                         # torch.clamp(min=1e-20)
        out_ref[...] = jnp.broadcast_to(cos, out_ref.shape)   # lane-dense store


def _round_up(x, m):
    return (x + m - 1) // m * m


def _choose_tiles(batch, seq, hidden, emb_itemsize, budget_bytes=24 << 20):
    """Pick (batch_tile, seq_tile) minimizing HBM padding waste within a VMEM budget."""
    b8 = _round_up(batch, 8)

    def bytes_per_row(ts):
        # emb blocks: 2 sides x double-buffered x ts*H*itemsize
        # + f32 reduction temporaries + mask blocks + accumulators.
        return ts * hidden * (4 * emb_itemsize + 8) + 16 * ts + 8 * hidden

    # Sequence tile: full S if it fits (no seq padding, no accumulation loop);
    # otherwise a multiple of 128 that minimizes round-up padding of S.
    if bytes_per_row(seq) * 8 <= budget_bytes:
        ts = seq
    else:
        best = None
        for c in (1024, 512, 384, 256, 128):
            if bytes_per_row(c) * 8 > budget_bytes:
                continue
            waste = (-seq) % c
            if best is None or waste < best[0] or (waste == best[0] and c > best[1]):
                best = (waste, c)
        ts = best[1] if best is not None else 128

    # Batch tile: as many rows as fit the budget, capped so that when possible
    # there are >= 2 batch blocks (megacore), and forced to divide the padded
    # batch so no extra batch rows are ever streamed from HBM.
    tb_cap = int(budget_bytes // max(bytes_per_row(ts), 1)) // 8 * 8
    tb_cap = max(8, min(tb_cap, b8))
    if b8 >= 16:
        tb_cap = min(tb_cap, max(8, (b8 // 2) // 8 * 8))
    tb = 8
    for t in range(tb_cap, 7, -8):
        if b8 % t == 0:
            tb = t
            break
    return tb, ts


def biencoder_forward_single(emb_t, mask_t, emb_c, mask_c):
    """Pallas wrapper. Returns cosine-similarity probabilities, shape (B,)."""
    B, S, H = emb_t.shape
    assert emb_c.shape == (B, S, H)
    assert mask_t.shape == (B, S) and mask_c.shape == (B, S)

    mask_t = mask_t.astype(jnp.float32)
    mask_c = mask_c.astype(jnp.float32)

    tb, ts = _choose_tiles(B, S, H, jnp.dtype(emb_t.dtype).itemsize)
    b_pad = _round_up(B, tb)
    s_pad = _round_up(S, ts)

    if b_pad != B or s_pad != S:
        pad3 = ((0, b_pad - B), (0, s_pad - S), (0, 0))
        pad2 = ((0, b_pad - B), (0, s_pad - S))
        emb_t = jnp.pad(emb_t, pad3)
        emb_c = jnp.pad(emb_c, pad3)
        mask_t = jnp.pad(mask_t, pad2)   # padded rows/cols get mask == 0
        mask_c = jnp.pad(mask_c, pad2)

    grid = (b_pad // tb, s_pad // ts)
    emb_spec = pl.BlockSpec((tb, ts, H), lambda i, k: (i, k, 0))
    mask_spec = pl.BlockSpec((tb, ts), lambda i, k: (i, k))
    out_spec = pl.BlockSpec((tb, _LANES), lambda i, k: (i, 0))

    out = pl.pallas_call(
        _biencoder_kernel,
        out_shape=jax.ShapeDtypeStruct((b_pad, _LANES), jnp.float32),
        grid=grid,
        in_specs=[emb_spec, mask_spec, emb_spec, mask_spec],
        out_specs=out_spec,
        scratch_shapes=[
            pltpu.VMEM((tb, H), jnp.float32),   # acc_t
            pltpu.VMEM((tb, 1), jnp.float32),   # den_t
            pltpu.VMEM((tb, H), jnp.float32),   # acc_c
            pltpu.VMEM((tb, 1), jnp.float32),   # den_c
        ],
        compiler_params=pltpu.CompilerParams(
            dimension_semantics=("parallel", "arbitrary"),
            vmem_limit_bytes=48 * 1024 * 1024,
        ),
    )(emb_t, mask_t, emb_c, mask_c)
    return out[:B, 0]


def _reference(emb_t, mask_t, emb_c, mask_c):
    """Plain-JAX mirror of the PyTorch BiEncoder.forward_single math."""
    def pool(emb, mask):
        m = mask.astype(jnp.float32)[:, :, None]
        e = emb.astype(jnp.float32)
        pooled = jnp.sum(e * m, axis=1) / jnp.maximum(jnp.sum(m, axis=1), 1e-9)
        norm = jnp.sqrt(jnp.sum(pooled * pooled, axis=1, keepdims=True))
        return pooled / jnp.maximum(norm, 1e-12)

    pt, pc = pool(emb_t, mask_t), pool(emb_c, mask_c)
    dot = jnp.sum(pt * pc, axis=1)
    nt = jnp.sqrt(jnp.sum(pt * pt, axis=1))
    nc = jnp.sqrt(jnp.sum(pc * pc, axis=1))
    cos = dot / (jnp.maximum(nt, 1e-8) * jnp.maximum(nc, 1e-8))
    return jnp.maximum(cos, 1e-20)


if __name__ == "__main__":
    base_key = jax.random.PRNGKey(0)

    def run_case(B, S, H, case_id):
        key = jax.random.fold_in(base_key, case_id)
        k1, k2, k3, k4 = jax.random.split(key, 4)
        # TODO(synk): the HF tokenizer + transformer encoder have no Pallas
        # equivalent; their outputs (token embeddings + attention masks) are
        # synthesized here, in the encoder's bf16 output dtype.
        emb_t = jax.random.normal(k1, (B, S, H), dtype=jnp.float32).astype(jnp.bfloat16)
        emb_c = jax.random.normal(k2, (B, S, H), dtype=jnp.float32).astype(jnp.bfloat16)
        # Variable-length attention masks (padding = 0), as a tokenizer would emit.
        len_t = jax.random.randint(k3, (B,), minval=4, maxval=S + 1)
        len_c = jax.random.randint(k4, (B,), minval=4, maxval=S + 1)
        pos = jnp.arange(S)[None, :]
        mask_t = (pos < len_t[:, None]).astype(jnp.float32)
        mask_c = (pos < len_c[:, None]).astype(jnp.float32)

        prob = jax.block_until_ready(
            biencoder_forward_single(emb_t, mask_t, emb_c, mask_c))
        ref = _reference(emb_t, mask_t, emb_c, mask_c)
        assert prob.shape == (B,), prob.shape
        assert jnp.allclose(prob, ref, rtol=1e-4, atol=1e-5), (prob, ref)

    # Small case: single block on both grid axes.
    run_case(B=8, S=16, H=32, case_id=0)
    # Larger case: exercises batch tiling (3 "parallel" blocks, zero padding).
    run_case(B=24, S=384, H=128, case_id=1)

    print("KERNEL_OK")
</pallas_src>

<mosaic_0001>
module attributes {stable_mosaic.version = 11 : i64} {
  func.func @_biencoder_kernel(%arg0: i32, %arg1: i32, %arg2: memref<8x16x32xbf16, #tpu.memory_space<vmem>>, %arg3: memref<8x16xf32, #tpu.memory_space<vmem>>, %arg4: memref<8x16x32xbf16, #tpu.memory_space<vmem>>, %arg5: memref<8x16xf32, #tpu.memory_space<vmem>>, %arg6: memref<8x128xf32, #tpu.memory_space<vmem>>, %arg7: memref<8x32xf32, #tpu.memory_space<vmem>>, %arg8: memref<8x1xf32, #tpu.memory_space<vmem>>, %arg9: memref<8x32xf32, #tpu.memory_space<vmem>>, %arg10: memref<8x1xf32, #tpu.memory_space<vmem>>) attributes {dimension_semantics = [#tpu.dimension_semantics<parallel>, #tpu.dimension_semantics<arbitrary>], iteration_bounds = array<i64: 1, 1>, scalar_prefetch = 0 : i64, scratch_operands = 4 : i64, tpu.core_type = #tpu.core_type<tc>, window_params = [{transform_indices = @transform_0, window_bounds = array<i64: 8, 16, 32>}, {transform_indices = @transform_1, window_bounds = array<i64: 8, 16>}, {transform_indices = @transform_2, window_bounds = array<i64: 8, 16, 32>}, {transform_indices = @transform_3, window_bounds = array<i64: 8, 16>}, {transform_indices = @transform_4, window_bounds = array<i64: 8, 128>}]} {
    %c0_i32 = arith.constant 0 : i32
    %0 = arith.cmpi eq, %arg1, %c0_i32 : i32
    %1 = arith.extui %0 : i1 to i32
    %c0_i32_0 = arith.constant 0 : i32
    %2 = arith.cmpi ne, %1, %c0_i32_0 : i32
    scf.if %2 {
      %cst_31 = arith.constant 0.000000e+00 : f32
      %38 = vector.broadcast %cst_31 : f32 to vector<8x32xf32>
      %c0_32 = arith.constant 0 : index
      %c0_33 = arith.constant 0 : index
      %39 = vector.load %arg7[%c0_32, %c0_33] : memref<8x32xf32, #tpu.memory_space<vmem>>, vector<8x32xf32>
      tpu.vector_store %arg7[%c0_32, %c0_33], %38 {strides = array<i32>} : memref<8x32xf32, #tpu.memory_space<vmem>>, vector<8x32xf32>,
      %cst_34 = arith.constant 0.000000e+00 : f32
      %40 = vector.broadcast %cst_34 : f32 to vector<8x32xf32>
      %c0_35 = arith.constant 0 : index
      %c0_36 = arith.constant 0 : index
      %41 = vector.load %arg9[%c0_35, %c0_36] : memref<8x32xf32, #tpu.memory_space<vmem>>, vector<8x32xf32>
      tpu.vector_store %arg9[%c0_35, %c0_36], %40 {strides = array<i32>} : memref<8x32xf32, #tpu.memory_space<vmem>>, vector<8x32xf32>,
      %cst_37 = arith.constant 0.000000e+00 : f32
      %42 = vector.broadcast %cst_37 : f32 to vector<8x1xf32>
      %c0_38 = arith.constant 0 : index
      %c0_39 = arith.constant 0 : index
      %43 = vector.load %arg8[%c0_38, %c0_39] : memref<8x1xf32, #tpu.memory_space<vmem>>, vector<8x1xf32>
      tpu.vector_store %arg8[%c0_38, %c0_39], %42 {strides = array<i32>} : memref<8x1xf32, #tpu.memory_space<vmem>>, vector<8x1xf32>,
      %cst_40 = arith.constant 0.000000e+00 : f32
      %44 = vector.broadcast %cst_40 : f32 to vector<8x1xf32>
      %c0_41 = arith.constant 0 : index
      %c0_42 = arith.constant 0 : index
      %45 = vector.load %arg10[%c0_41, %c0_42] : memref<8x1xf32, #tpu.memory_space<vmem>>, vector<8x1xf32>
      tpu.vector_store %arg10[%c0_41, %c0_42], %44 {strides = array<i32>} : memref<8x1xf32, #tpu.memory_space<vmem>>, vector<8x1xf32>,
    } else {
    }
    %c0 = arith.constant 0 : index
    %c0_1 = arith.constant 0 : index
    %3 = vector.load %arg3[%c0, %c0_1] : memref<8x16xf32, #tpu.memory_space<vmem>>, vector<8x16xf32>
    %c0_2 = arith.constant 0 : index
    %c0_3 = arith.constant 0 : index
    %c0_4 = arith.constant 0 : index
    %4 = vector.load %arg2[%c0_2, %c0_3, %c0_4] : memref<8x16x32xbf16, #tpu.memory_space<vmem>>, vector<8x16x32xbf16>
    %5 = arith.truncf %3 : vector<8x16xf32> to vector<8x16xbf16>
    %6 = vector.shape_cast %5 : vector<8x16xbf16> to vector<8x16x1xbf16>
    %7 = vector.broadcast %6 : vector<8x16x1xbf16> to vector<8x16x32xbf16>
    %8 = arith.mulf %4, %7 : vector<8x16x32xbf16>
    %c0_5 = arith.constant 0 : index
    %c0_6 = arith.constant 0 : index
    %9 = vector.load %arg7[%c0_5, %c0_6] : memref<8x32xf32, #tpu.memory_space<vmem>>, vector<8x32xf32>
    %10 = arith.extf %8 : vector<8x16x32xbf16> to vector<8x16x32xf32>
    %cst = arith.constant dense<0.000000e+00> : vector<8x32xf32>
    %11 = vector.multi_reduction <add>, %10, %cst [1] : vector<8x16x32xf32> to vector<8x32xf32>
    %12 = arith.addf %9, %11 : vector<8x32xf32>
    %c0_7 = arith.constant 0 : index
    %c0_8 = arith.constant 0 : index
    %13 = vector.load %arg7[%c0_7, %c0_8] : memref<8x32xf32, #tpu.memory_space<vmem>>, vector<8x32xf32>
    tpu.vector_store %arg7[%c0_7, %c0_8], %12 {strides = array<i32>} : memref<8x32xf32, #tpu.memory_space<vmem>>, vector<8x32xf32>,
    %c0_9 = arith.constant 0 : index
    %c0_10 = arith.constant 0 : index
    %14 = vector.load %arg8[%c0_9, %c0_10] : memref<8x1xf32, #tpu.memory_space<vmem>>, vector<8x1xf32>
    %cst_11 = arith.constant dense<0.000000e+00> : vector<8xf32>
    %15 = vector.multi_reduction <add>, %3, %cst_11 [1] : vector<8x16xf32> to vector<8xf32>
    %16 = vector.shape_cast %15 : vector<8xf32> to vector<8x1xf32>
    %17 = arith.addf %14, %16 : vector<8x1xf32>
    %c0_12 = arith.constant 0 : index
    %c0_13 = arith.constant 0 : index
    %18 = vector.load %arg8[%c0_12, %c0_13] : memref<8x1xf32, #tpu.memory_space<vmem>>, vector<8x1xf32>
    tpu.vector_store %arg8[%c0_12, %c0_13], %17 {strides = array<i32>} : memref<8x1xf32, #tpu.memory_space<vmem>>, vector<8x1xf32>,
    %c0_14 = arith.constant 0 : index
    %c0_15 = arith.constant 0 : index
    %19 = vector.load %arg5[%c0_14, %c0_15] : memref<8x16xf32, #tpu.memory_space<vmem>>, vector<8x16xf32>
    %c0_16 = arith.constant 0 : index
    %c0_17 = arith.constant 0 : index
    %c0_18 = arith.constant 0 : index
    %20 = vector.load %arg4[%c0_16, %c0_17, %c0_18] : memref<8x16x32xbf16, #tpu.memory_space<vmem>>, vector<8x16x32xbf16>
    %21 = arith.truncf %19 : vector<8x16xf32> to vector<8x16xbf16>
    %22 = vector.shape_cast %21 : vector<8x16xbf16> to vector<8x16x1xbf16>
    %23 = vector.broadcast %22 : vector<8x16x1xbf16> to vector<8x16x32xbf16>
    %24 = arith.mulf %20, %23 : vector<8x16x32xbf16>
    %c0_19 = arith.constant 0 : index
    %c0_20 = arith.constant 0 : index
    %25 = vector.load %arg9[%c0_19, %c0_20] : memref<8x32xf32, #tpu.memory_space<vmem>>, vector<8x32xf32>
    %26 = arith.extf %24 : vector<8x16x32xbf16> to vector<8x16x32xf32>
    %cst_21 = arith.constant dense<0.000000e+00> : vector<8x32xf32>
    %27 = vector.multi_reduction <add>, %26, %cst_21 [1] : vector<8x16x32xf32> to vector<8x32xf32>
    %28 = arith.addf %25, %27 : vector<8x32xf32>
    %c0_22 = arith.constant 0 : index
    %c0_23 = arith.constant 0 : index
    %29 = vector.load %arg9[%c0_22, %c0_23] : memref<8x32xf32, #tpu.memory_space<vmem>>, vector<8x32xf32>
    tpu.vector_store %arg9[%c0_22, %c0_23], %28 {strides = array<i32>} : memref<8x32xf32, #tpu.memory_space<vmem>>, vector<8x32xf32>,
    %c0_24 = arith.constant 0 : index
    %c0_25 = arith.constant 0 : index
    %30 = vector.load %arg10[%c0_24, %c0_25] : memref<8x1xf32, #tpu.memory_space<vmem>>, vector<8x1xf32>
    %cst_26 = arith.constant dense<0.000000e+00> : vector<8xf32>
    %31 = vector.multi_reduction <add>, %19, %cst_26 [1] : vector<8x16xf32> to vector<8xf32>
    %32 = vector.shape_cast %31 : vector<8xf32> to vector<8x1xf32>
    %33 = arith.addf %30, %32 : vector<8x1xf32>
    %c0_27 = arith.constant 0 : index
    %c0_28 = arith.constant 0 : index
    %34 = vector.load %arg10[%c0_27, %c0_28] : memref<8x1xf32, #tpu.memory_space<vmem>>, vector<8x1xf32>
    tpu.vector_store %arg10[%c0_27, %c0_28], %33 {strides = array<i32>} : memref<8x1xf32, #tpu.memory_space<vmem>>, vector<8x1xf32>,
    %c0_i32_29 = arith.constant 0 : i32
    %35 = arith.cmpi eq, %arg1, %c0_i32_29 : i32
    %36 = arith.extui %35 : i1 to i32
    %c0_i32_30 = arith.constant 0 : i32
    %37 = arith.cmpi ne, %36, %c0_i32_30 : i32
    scf.if %37 {
      %c0_31 = arith.constant 0 : index
      %c0_32 = arith.constant 0 : index
      %38 = vector.load %arg8[%c0_31, %c0_32] : memref<8x1xf32, #tpu.memory_space<vmem>>, vector<8x1xf32>
      %cst_33 = arith.constant 9.99999971E-10 : f32
      %39 = vector.broadcast %cst_33 : f32 to vector<8x1xf32>
      %40 = arith.maximumf %38, %39 : vector<8x1xf32>
      %41 = tpu.reciprocal %40 : vector<8x1xf32> -> vector<8x1xf32>
      %c0_34 = arith.constant 0 : index
      %c0_35 = arith.constant 0 : index
      %42 = vector.load %arg7[%c0_34, %c0_35] : memref<8x32xf32, #tpu.memory_space<vmem>>, vector<8x32xf32>
      %43 = vector.broadcast %41 : vector<8x1xf32> to vector<8x32xf32>
      %44 = arith.mulf %42, %43 : vector<8x32xf32>
      %45 = arith.mulf %44, %44 : vector<8x32xf32>
      %cst_36 = arith.constant dense<0.000000e+00> : vector<8xf32>
      %46 = vector.multi_reduction <add>, %45, %cst_36 [1] : vector<8x32xf32> to vector<8xf32>
      %47 = vector.shape_cast %46 : vector<8xf32> to vector<8x1xf32>
      %cst_37 = arith.constant 1.000000e-24 : f32
      %48 = vector.broadcast %cst_37 : f32 to vector<8x1xf32>
      %49 = arith.maximumf %47, %48 : vector<8x1xf32>
      %50 = math.rsqrt %49 : vector<8x1xf32>
      %51 = vector.broadcast %50 : vector<8x1xf32> to vector<8x32xf32>
      %52 = arith.mulf %44, %51 : vector<8x32xf32>
      %c0_38 = arith.constant 0 : index
      %c0_39 = arith.constant 0 : index
      %53 = vector.load %arg10[%c0_38, %c0_39] : memref<8x1xf32, #tpu.memory_space<vmem>>, vector<8x1xf32>
      %cst_40 = arith.constant 9.99999971E-10 : f32
      %54 = vector.broadcast %cst_40 : f32 to vector<8x1xf32>
      %55 = arith.maximumf %53, %54 : vector<8x1xf32>
      %56 = tpu.reciprocal %55 : vector<8x1xf32> -> vector<8x1xf32>
      %c0_41 = arith.constant 0 : index
      %c0_42 = arith.constant 0 : index
      %57 = vector.load %arg9[%c0_41, %c0_42] : memref<8x32xf32, #tpu.memory_space<vmem>>, vector<8x32xf32>
      %58 = vector.broadcast %56 : vector<8x1xf32> to vector<8x32xf32>
      %59 = arith.mulf %57, %58 : vector<8x32xf32>
      %60 = arith.mulf %59, %59 : vector<8x32xf32>
      %cst_43 = arith.constant dense<0.000000e+00> : vector<8xf32>
      %61 = vector.multi_reduction <add>, %60, %cst_43 [1] : vector<8x32xf32> to vector<8xf32>
      %62 = vector.shape_cast %61 : vector<8xf32> to vector<8x1xf32>
      %cst_44 = arith.constant 1.000000e-24 : f32
      %63 = vector.broadcast %cst_44 : f32 to vector<8x1xf32>
      %64 = arith.maximumf %62, %63 : vector<8x1xf32>
      %65 = math.rsqrt %64 : vector<8x1xf32>
      %66 = vector.broadcast %65 : vector<8x1xf32> to vector<8x32xf32>
      %67 = arith.mulf %59, %66 : vector<8x32xf32>
      %68 = arith.mulf %52, %67 : vector<8x32xf32>
      %cst_45 = arith.constant dense<0.000000e+00> : vector<8xf32>
      %69 = vector.multi_reduction <add>, %68, %cst_45 [1] : vector<8x32xf32> to vector<8xf32>
      %70 = vector.shape_cast %69 : vector<8xf32> to vector<8x1xf32>
      %cst_46 = arith.constant 9.99999968E-21 : f32
      %71 = vector.broadcast %cst_46 : f32 to vector<8x1xf32>
      %72 = arith.maximumf %70, %71 : vector<8x1xf32>
      %73 = vector.shape_cast %72 : vector<8x1xf32> to vector<8x1xf32>
      %74 = vector.broadcast %73 : vector<8x1xf32> to vector<8x128xf32>
      %c0_47 = arith.constant 0 : index
      %c0_48 = arith.constant 0 : index
      %75 = vector.load %arg6[%c0_47, %c0_48] : memref<8x128xf32, #tpu.memory_space<vmem>>, vector<8x128xf32>
      tpu.vector_store %arg6[%c0_47, %c0_48], %74 {strides = array<i32>} : memref<8x128xf32, #tpu.memory_space<vmem>>, vector<8x128xf32>,
    } else {
    }
    return
  }
  func.func @transform_0(%arg0: i32, %arg1: i32) -> (i32, i32, i32) {
    %c0_i32 = arith.constant 0 : i32
    %c0_i32_0 = arith.constant 0 : i32
    return %arg0, %arg1, %c0_i32 : i32, i32, i32
  }
  func.func @transform_1(%arg0: i32, %arg1: i32) -> (i32, i32) {
    %c0_i32 = arith.constant 0 : i32
    return %arg0, %arg1 : i32, i32
  }
  func.func @transform_2(%arg0: i32, %arg1: i32) -> (i32, i32, i32) {
    %c0_i32 = arith.constant 0 : i32
    %c0_i32_0 = arith.constant 0 : i32
    return %arg0, %arg1, %c0_i32 : i32, i32, i32
  }
  func.func @transform_3(%arg0: i32, %arg1: i32) -> (i32, i32) {
    %c0_i32 = arith.constant 0 : i32
    return %arg0, %arg1 : i32, i32
  }
  func.func @transform_4(%arg0: i32, %arg1: i32) -> (i32, i32) {
    %c0_i32 = arith.constant 0 : i32
    %c0_i32_0 = arith.constant 0 : i32
    return %arg0, %c0_i32 : i32, i32
  }
}

</mosaic_0001>

<llo_original>
// kernel: tpu_custom_call.1
$region0: #{tpu_custom_call.1}
  #allocation0 [shape = 'u32[]', space=smem, size = 0x4, offset = 0x4, fixed_abs, tag = 'smem constant byte address 0x4 - core index']
  #allocation1 [shape = 'u32[144,128]{1,0:T(1,128)}', space=vmem, size = 0x12000, scoped, tag = 'internal scratch']
  #allocation2 [shape = 'f32[8,32]{1,0:T(8,128)}', space=vmem, size = 0x1000, scoped, tag = 'scratch operand']
  #allocation3 [shape = 'f32[8,1]{1,0:T(8,128)}', space=vmem, size = 0x1000, scoped, tag = 'scratch operand']
  #allocation4 [shape = 'f32[8,32]{1,0:T(8,128)}', space=vmem, size = 0x1000, scoped, tag = 'scratch operand']
  #allocation5 [shape = 'f32[8,1]{1,0:T(8,128)}', space=vmem, size = 0x1000, scoped, tag = 'scratch operand']
  %s0 = inlined_call_operand.hbm [shape: bf16[8,16,32], index: 0, kind: input, shape index: {}]
  %s1 = inlined_call_operand.hbm [shape: f32[8,16], index: 1, kind: input, shape index: {}]
  %s2 = inlined_call_operand.hbm [shape: bf16[8,16,32], index: 2, kind: input, shape index: {}]
  %s3 = inlined_call_operand.vmem [shape: f32[8,16], index: 3, kind: input, shape index: {}]
  %s4 = inlined_call_operand.hbm [shape: f32[8,128], index: 4, kind: output, shape index: {}]
  %s5 = sld [smem:[#allocation0]]
  $region46: #{tpu_custom_call.1} parent=0
    _
  %s7 = ssub.s32 1, %s5
  %s8 = scalar_select 0, %s7, %s5
  $region1: #{tpu_custom_call.1} parent=0
    #allocation6 [shape = 'u8[32768]{0}', space=vmem, size = 0x8000, scoped, tag = 'input window, operand 0, single buffered']
    #allocation7 [shape = 's32[1]{0}', space=sflag, size = 0x4, scoped, tag = 'scoped memory for tpu_custom_call.1']
    #allocation8 [shape = 's32[1]{0}', space=sflag, size = 0x4, scoped, tag = 'scoped memory for tpu_custom_call.1']
    #allocation9 [shape = 'u8[4096]{0}', space=vmem, size = 0x1000, scoped, tag = 'input window, operand 1, single buffered']
    #allocation10 [shape = 's32[1]{0}', space=sflag, size = 0x4, scoped, tag = 'scoped memory for tpu_custom_call.1']
    #allocation11 [shape = 'u8[32768]{0}', space=vmem, size = 0x8000, scoped, tag = 'input window, operand 2, single buffered']
    #allocation12 [shape = 'u8[4096]{0}', space=vmem, size = 0x1000, scoped, tag = 'output window, operand 0, single buffered']
    %9 = vsyncpa [#allocation7], 0
    %10 = vsyncpa [#allocation10], 0
    %11 = vsyncpa [#allocation8], 0
    // Predicated region
    $region2: #{tpu_custom_call.1} parent=1 // pred_check
      _
    $region3: #{tpu_custom_call.1} parent=1 // pred_check_branch
      %13 = sbr.rel (0) target = $region5
    $region4: #{tpu_custom_call.1} parent=1 // pred_region
      %s15 = ssub.s32 1024, 1024
      %16 = vsyncadd [#allocation7], %s15
      %s17 = sshll.u32 [#allocation6], 4
      %s18 = int_to_ptr.vmem [resolvable:$true] %s17
      %23 = dma.hbm_to_vmem [thread:$0]  %s0, 1024, %s18, [#allocation7], 64, 64, 4
    $region5: #{tpu_custom_call.1} parent=1 // pred_fallthru
      _
    // Predicated region
    $region6: #{tpu_custom_call.1} parent=1 // pred_check
      _
    $region7: #{tpu_custom_call.1} parent=1 // pred_check_branch
      %25 = sbr.rel (0) target = $region9
    $region8: #{tpu_custom_call.1} parent=1 // pred_region
      %s27 = ssub.s32 128, 128
      %28 = vsyncadd [#allocation10], %s27
      %s30 = sshll.u32 [#allocation9], 4
      %s31 = int_to_ptr.vmem [resolvable:$true] %s30
      %33 = dma.hbm_to_vmem [thread:$0]  %s1, 128, %s31, [#allocation10]
    $region9: #{tpu_custom_call.1} parent=1 // pred_fallthru
      _
    // Predicated region
    $region10: #{tpu_custom_call.1} parent=1 // pred_check
      _
    $region11: #{tpu_custom_call.1} parent=1 // pred_check_branch
      %35 = sbr.rel (0) target = $region13
    $region12: #{tpu_custom_call.1} parent=1 // pred_region
      %s37 = ssub.s32 1024, 1024
      %38 = vsyncadd [#allocation10], %s37
      %s39 = sshll.u32 [#allocation11], 4
      %s40 = int_to_ptr.vmem [resolvable:$true] %s39
      %45 = dma.hbm_to_vmem [thread:$0]  %s2, 1024, %s40, [#allocation10], 64, 64, 4
    $region13: #{tpu_custom_call.1} parent=1 // pred_fallthru
      _
    // Predicated region
    $region14: #{tpu_custom_call.1} parent=1 // pred_check
      _
    $region15: #{tpu_custom_call.1} parent=1 // pred_check_branch
      %47 = sbr.rel (0) target = $region17
    $region16: #{tpu_custom_call.1} parent=1 // pred_region
      _
    $region17: #{tpu_custom_call.1} parent=1 // pred_fallthru
      _
    // Predicated region
    $region18: #{tpu_custom_call.1} parent=1 // pred_check
      _
    $region19: #{tpu_custom_call.1} parent=1 // pred_check_branch
      %49 = sbr.rel (0) target = $region21
    $region20: #{tpu_custom_call.1} parent=1 // pred_region
      %50 = dma.done [#allocation7], 1024
    $region21: #{tpu_custom_call.1} parent=1 // pred_fallthru
      _
    // Predicated region
    $region22: #{tpu_custom_call.1} parent=1 // pred_check
      _
    $region23: #{tpu_custom_call.1} parent=1 // pred_check_branch
      %52 = sbr.rel (0) target = $region25
    $region24: #{tpu_custom_call.1} parent=1 // pred_region
      %53 = dma.done [#allocation10], 128
    $region25: #{tpu_custom_call.1} parent=1 // pred_fallthru
      _
    // Predicated region
    $region26: #{tpu_custom_call.1} parent=1 // pred_check
      _
    $region27: #{tpu_custom_call.1} parent=1 // pred_check_branch
      %55 = sbr.rel (0) target = $region29
    $region28: #{tpu_custom_call.1} parent=1 // pred_region
      %56 = dma.done [#allocation10], 1024
    $region29: #{tpu_custom_call.1} parent=1 // pred_fallthru
      _
    %p57 = scmp.eq.s32.totalorder 0, 0
    // Predicated region
    $region30: #{tpu_custom_call.1} parent=1 // pred_check
      %p58 = pneg %p57
    $region31: #{tpu_custom_call.1} parent=1 // pred_check_branch
      %60 = sbr.rel (%p58) target = $region33
    $region32: #{tpu_custom_call.1} parent=1 // pred_region
      %vm61 = vcmask 261120
      %62 = vst.msk [vmem:[#allocation2] sm:$0xff] %vm61, 0.0
      %63 = vst.msk [vmem:[#allocation4] sm:$0xff] %vm61, 0.0
      %vm64 = vcmask 7168
      %65 = vst.msk [vmem:[#allocation3] sm:$0xff] %vm64, 0.0
      %66 = vst.msk [vmem:[#allocation5] sm:$0xff] %vm64, 0.0
    $region33: #{tpu_custom_call.1} parent=1 // pred_fallthru
      _
    %v67 = vld [vmem:[#allocation9] sm:$0xff]
    %v68 = vld [vmem:[#allocation6] sm:$0xf]
    %v69 = vld [vmem:[#allocation6 + $0x4] sm:$0xf]
    %v70 = vld [vmem:[#allocation6 + $0x8] sm:$0xf]
    %v71 = vld [vmem:[#allocation6 + $0xc] sm:$0xf]
    %v72 = vld [vmem:[#allocation6 + $0x10] sm:$0xf]
    %v73 = vld [vmem:[#allocation6 + $0x14] sm:$0xf]
    %v74 = vld [vmem:[#allocation6 + $0x18] sm:$0xf]
    %v75 = vld [vmem:[#allocation6 + $0x1c] sm:$0xf]
    %v76 = vld [vmem:[#allocation6 + $0x20] sm:$0xf]
    %v77 = vld [vmem:[#allocation6 + $0x24] sm:$0xf]
    %v78 = vld [vmem:[#allocation6 + $0x28] sm:$0xf]
    %v79 = vld [vmem:[#allocation6 + $0x2c] sm:$0xf]
    %v80 = vld [vmem:[#allocation6 + $0x30] sm:$0xf]
    %v81 = vld [vmem:[#allocation6 + $0x34] sm:$0xf]
    %v82 = vld [vmem:[#allocation6 + $0x38] sm:$0xf]
    %v83 = vld [vmem:[#allocation6 + $0x3c] sm:$0xf]
    %v84 = vpack.c.bf16 %v67, %v67
    %v86 = vpack.i.b16 %v84, %v84
    %v88 = vlaneseq
    %v89 = vshrl.u32 %v88, 7
    %v90 = vsub.s32 0, %v89
    %v91 = vrot.slane %v86, %v90
    %93 = vbcast.lane.c.b16.xlu0 %v91, 256
    %v94 = vpop.permute.xlu0 %93
    %v95 = vshrl.u32 %v84, 16
    %v96 = vpack.i.b16 %v95, %v95
    %v98 = vlaneseq
    %v99 = vshrl.u32 %v98, 7
    %v100 = vsub.s32 0, %v99
    %v101 = vrot.slane %v96, %v100
    %103 = vbcast.lane.c.b16.xlu0 %v101, 256
    %v104 = vpop.permute.xlu0 %103
    %v105 = vlaneseq
    %v106 = vshrl.u32 %v105, 7
    %v107 = vsub.s32 1, %v106
    %v108 = vrot.slane %v86, %v107
    %110 = vbcast.lane.c.b16.xlu0 %v108, 256
    %v111 = vpop.permute.xlu0 %110
    %v112 = vlaneseq
    %v113 = vshrl.u32 %v112, 7
    %v114 = vsub.s32 1, %v113
    %v115 = vrot.slane %v96, %v114
    %117 = vbcast.lane.c.b16.xlu0 %v115, 256
    %v118 = vpop.permute.xlu0 %117
    %v119 = vlaneseq
    %v120 = vshrl.u32 %v119, 7
    %v121 = vsub.s32 2, %v120
    %v122 = vrot.slane %v86, %v121
    %124 = vbcast.lane.c.b16.xlu0 %v122, 256
    %v125 = vpop.permute.xlu0 %124
    %v126 = vlaneseq
    %v127 = vshrl.u32 %v126, 7
    %v128 = vsub.s32 2, %v127
    %v129 = vrot.slane %v96, %v128
    %131 = vbcast.lane.c.b16.xlu0 %v129, 256
    %v132 = vpop.permute.xlu0 %131
    %v133 = vlaneseq
    %v134 = vshrl.u32 %v133, 7
    %v135 = vsub.s32 3, %v134
    %v136 = vrot.slane %v86, %v135
    %138 = vbcast.lane.c.b16.xlu0 %v136, 256
    %v139 = vpop.permute.xlu0 %138
    %v140 = vlaneseq
    %v141 = vshrl.u32 %v140, 7
    %v142 = vsub.s32 3, %v141
    %v143 = vrot.slane %v96, %v142
    %145 = vbcast.lane.c.b16.xlu0 %v143, 256
    %v146 = vpop.permute.xlu0 %145
    %v156 = vunpack.c.l.s4 839922192
    %v157 = vunpack.c.0.s8 %v156
    %v158 = vlaneseq
    %v159 = vshrl.u32 %v158, 7
    %v160 = vsub.s32 %v157, %v159
    %v161 = vrot.slane %v94, %v160
    %v163 = vunpack.c.l.s4 1985246804
    %v164 = vunpack.c.0.s8 %v163
    %v165 = vlaneseq
    %v166 = vshrl.u32 %v165, 7
    %v167 = vsub.s32 %v164, %v166
    %v168 = vrot.slane %v94, %v167
    %v170 = vunpack.c.l.s4 839922192
    %v171 = vunpack.c.0.s8 %v170
    %v172 = vlaneseq
    %v173 = vshrl.u32 %v172, 7
    %v174 = vsub.s32 %v171, %v173
    %v175 = vrot.slane %v104, %v174
    %v177 = vunpack.c.l.s4 1985246804
    %v178 = vunpack.c.0.s8 %v177
    %v179 = vlaneseq
    %v180 = vshrl.u32 %v179, 7
    %v181 = vsub.s32 %v178, %v180
    %v182 = vrot.slane %v104, %v181
    %v184 = vunpack.c.l.s4 839922192
    %v185 = vunpack.c.0.s8 %v184
    %v186 = vlaneseq
    %v187 = vshrl.u32 %v186, 7
    %v188 = vsub.s32 %v185, %v187
    %v189 = vrot.slane %v111, %v188
    %v191 = vunpack.c.l.s4 1985246804
    %v192 = vunpack.c.0.s8 %v191
    %v193 = vlaneseq
    %v194 = vshrl.u32 %v193, 7
    %v195 = vsub.s32 %v192, %v194
    %v196 = vrot.slane %v111, %v195
    %v198 = vunpack.c.l.s4 839922192
    %v199 = vunpack.c.0.s8 %v198
    %v200 = vlaneseq
    %v201 = vshrl.u32 %v200, 7
    %v202 = vsub.s32 %v199, %v201
    %v203 = vrot.slane %v118, %v202
    %v205 = vunpack.c.l.s4 1985246804
    %v206 = vunpack.c.0.s8 %v205
    %v207 = vlaneseq
    %v208 = vshrl.u32 %v207, 7
    %v209 = vsub.s32 %v206, %v208
    %v210 = vrot.slane %v118, %v209
    %v212 = vunpack.c.l.s4 839922192
    %v213 = vunpack.c.0.s8 %v212
    %v214 = vlaneseq
    %v215 = vshrl.u32 %v214, 7
    %v216 = vsub.s32 %v213, %v215
    %v217 = vrot.slane %v125, %v216
    %v219 = vunpack.c.l.s4 1985246804
    %v220 = vunpack.c.0.s8 %v219
    %v221 = vlaneseq
    %v222 = vshrl.u32 %v221, 7
    %v223 = vsub.s32 %v220, %v222
    %v224 = vrot.slane %v125, %v223
    %v226 = vunpack.c.l.s4 839922192
    %v227 = vunpack.c.0.s8 %v226
    %v228 = vlaneseq
    %v229 = vshrl.u32 %v228, 7
    %v230 = vsub.s32 %v227, %v229
    %v231 = vrot.slane %v132, %v230
    %v233 = vunpack.c.l.s4 1985246804
    %v234 = vunpack.c.0.s8 %v233
    %v235 = vlaneseq
    %v236 = vshrl.u32 %v235, 7
    %v237 = vsub.s32 %v234, %v236
    %v238 = vrot.slane %v132, %v237
    %v240 = vunpack.c.l.s4 839922192
    %v241 = vunpack.c.0.s8 %v240
    %v242 = vlaneseq
    %v243 = vshrl.u32 %v242, 7
    %v244 = vsub.s32 %v241, %v243
    %v245 = vrot.slane %v139, %v244
    %v247 = vunpack.c.l.s4 1985246804
    %v248 = vunpack.c.0.s8 %v247
    %v249 = vlaneseq
    %v250 = vshrl.u32 %v249, 7
    %v251 = vsub.s32 %v248, %v250
    %v252 = vrot.slane %v139, %v251
    %v254 = vunpack.c.l.s4 839922192
    %v255 = vunpack.c.0.s8 %v254
    %v256 = vlaneseq
    %v257 = vshrl.u32 %v256, 7
    %v258 = vsub.s32 %v255, %v257
    %v259 = vrot.slane %v146, %v258
    %v261 = vunpack.c.l.s4 1985246804
    %v262 = vunpack.c.0.s8 %v261
    %v263 = vlaneseq
    %v264 = vshrl.u32 %v263, 7
    %v265 = vsub.s32 %v262, %v264
    %v266 = vrot.slane %v146, %v265
    %v283 = vmul.bf16 %v68, %v161
    %v284 = vmul.bf16 %v69, %v168
    %v285 = vmul.bf16 %v70, %v175
    %v286 = vmul.bf16 %v71, %v182
    %v287 = vmul.bf16 %v72, %v189
    %v288 = vmul.bf16 %v73, %v196
    %v289 = vmul.bf16 %v74, %v203
    %v290 = vmul.bf16 %v75, %v210
    %v291 = vmul.bf16 %v76, %v217
    %v292 = vmul.bf16 %v77, %v224
    %v293 = vmul.bf16 %v78, %v231
    %v294 = vmul.bf16 %v79, %v238
    %v295 = vmul.bf16 %v80, %v245
    %v296 = vmul.bf16 %v81, %v252
    %v297 = vmul.bf16 %v82, %v259
    %v298 = vmul.bf16 %v83, %v266
    %v299 = vld [vmem:[#allocation2] sm:$0xff]
    %v300 = vunpack.c.l.bf16 %v283
    %v301 = vunpack.c.l.bf16 %v284
    %v302 = vunpack.c.l.bf16 %v285
    %v303 = vunpack.c.l.bf16 %v286
    %v304 = vunpack.c.l.bf16 %v287
    %v305 = vunpack.c.l.bf16 %v288
    %v306 = vunpack.c.l.bf16 %v289
    %v307 = vunpack.c.l.bf16 %v290
    %v308 = vunpack.c.l.bf16 %v291
    %v309 = vunpack.c.l.bf16 %v292
    %v310 = vunpack.c.l.bf16 %v293
    %v311 = vunpack.c.l.bf16 %v294
    %v312 = vunpack.c.l.bf16 %v295
    %v313 = vunpack.c.l.bf16 %v296
    %v314 = vunpack.c.l.bf16 %v297
    %v315 = vunpack.c.l.bf16 %v298
    %vm316 = vcmask 261120
    %v317 = vsel %vm316, %v300, 0.0
    %v318 = vsel %vm316, %v301, 0.0
    %v319 = vadd.f32 %v317, %v318
    %v320 = vrot.slane %v319, 4
    %v321 = vadd.f32 %v319, %v320
    %v322 = vrot.slane %v321, 2
    %v323 = vadd.f32 %v321, %v322
    %v324 = vrot.slane %v323, 1
    %v325 = vadd.f32 %v323, %v324
    %v326 = vsel %vm316, %v302, 0.0
    %v327 = vsel %vm316, %v303, 0.0
    %v328 = vadd.f32 %v326, %v327
    %v329 = vrot.slane %v328, 4
    %v330 = vadd.f32 %v328, %v329
    %v331 = vrot.slane %v330, 2
    %v332 = vadd.f32 %v330, %v331
    %v333 = vrot.slane %v332, 1
    %v334 = vadd.f32 %v332, %v333
    %v335 = vsel %vm316, %v304, 0.0
    %v336 = vsel %vm316, %v305, 0.0
    %v337 = vadd.f32 %v335, %v336
    %v338 = vrot.slane %v337, 4
    %v339 = vadd.f32 %v337, %v338
    %v340 = vrot.slane %v339, 2
    %v341 = vadd.f32 %v339, %v340
    %v342 = vrot.slane %v341, 1
    %v343 = vadd.f32 %v341, %v342
    %v344 = vsel %vm316, %v306, 0.0
    %v345 = vsel %vm316, %v307, 0.0
    %v346 = vadd.f32 %v344, %v345
    %v347 = vrot.slane %v346, 4
    %v348 = vadd.f32 %v346, %v347
    %v349 = vrot.slane %v348, 2
    %v350 = vadd.f32 %v348, %v349
    %v351 = vrot.slane %v350, 1
    %v352 = vadd.f32 %v350, %v351
    %v353 = vsel %vm316, %v308, 0.0
    %v354 = vsel %vm316, %v309, 0.0
    %v355 = vadd.f32 %v353, %v354
    %v356 = vrot.slane %v355, 4
    %v357 = vadd.f32 %v355, %v356
    %v358 = vrot.slane %v357, 2
    %v359 = vadd.f32 %v357, %v358
    %v360 = vrot.slane %v359, 1
    %v361 = vadd.f32 %v359, %v360
    %v362 = vsel %vm316, %v310, 0.0
    %v363 = vsel %vm316, %v311, 0.0
    %v364 = vadd.f32 %v362, %v363
    %v365 = vrot.slane %v364, 4
    %v366 = vadd.f32 %v364, %v365
    %v367 = vrot.slane %v366, 2
    %v368 = vadd.f32 %v366, %v367
    %v369 = vrot.slane %v368, 1
    %v370 = vadd.f32 %v368, %v369
    %v371 = vsel %vm316, %v312, 0.0
    %v372 = vsel %vm316, %v313, 0.0
    %v373 = vadd.f32 %v371, %v372
    %v374 = vrot.slane %v373, 4
    %v375 = vadd.f32 %v373, %v374
    %v376 = vrot.slane %v375, 2
    %v377 = vadd.f32 %v375, %v376
    %v378 = vrot.slane %v377, 1
    %v379 = vadd.f32 %v377, %v378
    %v380 = vsel %vm316, %v314, 0.0
    %v381 = vsel %vm316, %v315, 0.0
    %v382 = vadd.f32 %v380, %v381
    %v383 = vrot.slane %v382, 4
    %v384 = vadd.f32 %v382, %v383
    %v385 = vrot.slane %v384, 2
    %v386 = vadd.f32 %v384, %v385
    %v387 = vrot.slane %v386, 1
    %v388 = vadd.f32 %v386, %v387
    %vm397 = vcmask 1041409
    %v398 = vsel %vm397, %v334, %v325
    %vm399 = vcmask 1042434
    %v400 = vsel %vm399, %v343, %v398
    %vm401 = vcmask 1043459
    %v402 = vsel %vm401, %v352, %v400
    %vm403 = vcmask 1044484
    %v404 = vsel %vm403, %v361, %v402
    %vm405 = vcmask 1045509
    %v406 = vsel %vm405, %v370, %v404
    %vm407 = vcmask 1046534
    %v408 = vsel %vm407, %v379, %v406
    %vm409 = vcmask 1047559
    %v410 = vsel %vm409, %v388, %v408
    %v412 = vadd.f32 %v299, %v410
    %413 = vst.msk [vmem:[#allocation2] sm:$0xff] %vm316, %v412
    %v414 = vld [vmem:[#allocation3] sm:$0xff]
    %vm415 = vcmask 130048
    %v416 = vsel %vm415, %v67, 0.0
    %417 = vadd.xlane.f32.xlu0 %v416
    %v418 = vpop.xlane.xlu0 %417
    %v419 = vadd.f32 %v414, %v418
    %vm420 = vcmask 7168
    %421 = vst.msk [vmem:[#allocation3] sm:$0xff] %vm420, %v419
    %v422 = vld [vmem:[%s3] sm:$0xff]
    %v423 = vld [vmem:[#allocation11] sm:$0xf]
    %v424 = vld [vmem:[#allocation11 + $0x4] sm:$0xf]
    %v425 = vld [vmem:[#allocation11 + $0x8] sm:$0xf]
    %v426 = vld [vmem:[#allocation11 + $0xc] sm:$0xf]
    %v427 = vld [vmem:[#allocation11 + $0x10] sm:$0xf]
    %v428 = vld [vmem:[#allocation11 + $0x14] sm:$0xf]
    %v429 = vld [vmem:[#allocation11 + $0x18] sm:$0xf]
    %v430 = vld [vmem:[#allocation11 + $0x1c] sm:$0xf]
    %v431 = vld [vmem:[#allocation11 + $0x20] sm:$0xf]
    %v432 = vld [vmem:[#allocation11 + $0x24] sm:$0xf]
    %v433 = vld [vmem:[#allocation11 + $0x28] sm:$0xf]
    %v434 = vld [vmem:[#allocation11 + $0x2c] sm:$0xf]
    %v435 = vld [vmem:[#allocation11 + $0x30] sm:$0xf]
    %v436 = vld [vmem:[#allocation11 + $0x34] sm:$0xf]
    %v437 = vld [vmem:[#allocation11 + $0x38] sm:$0xf]
    %v438 = vld [vmem:[#allocation11 + $0x3c] sm:$0xf]
    %v439 = vpack.c.bf16 %v422, %v422
    %v441 = vpack.i.b16 %v439, %v439
    %v443 = vlaneseq
    %v444 = vshrl.u32 %v443, 7
    %v445 = vsub.s32 0, %v444
    %v446 = vrot.slane %v441, %v445
    %448 = vbcast.lane.c.b16.xlu0 %v446, 256
    %v449 = vpop.permute.xlu0 %448
    %v450 = vshrl.u32 %v439, 16
    %v451 = vpack.i.b16 %v450, %v450
    %v453 = vlaneseq
    %v454 = vshrl.u32 %v453, 7
    %v455 = vsub.s32 0, %v454
    %v456 = vrot.slane %v451, %v455
    %458 = vbcast.lane.c.b16.xlu0 %v456, 256
    %v459 = vpop.permute.xlu0 %458
    %v460 = vlaneseq
    %v461 = vshrl.u32 %v460, 7
    %v462 = vsub.s32 1, %v461
    %v463 = vrot.slane %v441, %v462
    %465 = vbcast.lane.c.b16.xlu0 %v463, 256
    %v466 = vpop.permute.xlu0 %465
    %v467 = vlaneseq
    %v468 = vshrl.u32 %v467, 7
    %v469 = vsub.s32 1, %v468
    %v470 = vrot.slane %v451, %v469
    %472 = vbcast.lane.c.b16.xlu0 %v470, 256
    %v473 = vpop.permute.xlu0 %472
    %v474 = vlaneseq
    %v475 = vshrl.u32 %v474, 7
    %v476 = vsub.s32 2, %v475
    %v477 = vrot.slane %v441, %v476
    %479 = vbcast.lane.c.b16.xlu0 %v477, 256
    %v480 = vpop.permute.xlu0 %479
    %v481 = vlaneseq
    %v482 = vshrl.u32 %v481, 7
    %v483 = vsub.s32 2, %v482
    %v484 = vrot.slane %v451, %v483
    %486 = vbcast.lane.c.b16.xlu0 %v484, 256
    %v487 = vpop.permute.xlu0 %486
    %v488 = vlaneseq
    %v489 = vshrl.u32 %v488, 7
    %v490 = vsub.s32 3, %v489
    %v491 = vrot.slane %v441, %v490
    %493 = vbcast.lane.c.b16.xlu0 %v491, 256
    %v494 = vpop.permute.xlu0 %493
    %v495 = vlaneseq
    %v496 = vshrl.u32 %v495, 7
    %v497 = vsub.s32 3, %v496
    %v498 = vrot.slane %v451, %v497
    %500 = vbcast.lane.c.b16.xlu0 %v498, 256
    %v501 = vpop.permute.xlu0 %500
    %v511 = vunpack.c.l.s4 839922192
    %v512 = vunpack.c.0.s8 %v511
    %v513 = vlaneseq
    %v514 = vshrl.u32 %v513, 7
    %v515 = vsub.s32 %v512, %v514
    %v516 = vrot.slane %v449, %v515
    %v518 = vunpack.c.l.s4 1985246804
    %v519 = vunpack.c.0.s8 %v518
    %v520 = vlaneseq
    %v521 = vshrl.u32 %v520, 7
    %v522 = vsub.s32 %v519, %v521
    %v523 = vrot.slane %v449, %v522
    %v525 = vunpack.c.l.s4 839922192
    %v526 = vunpack.c.0.s8 %v525
    %v527 = vlaneseq
    %v528 = vshrl.u32 %v527, 7
    %v529 = vsub.s32 %v526, %v528
    %v530 = vrot.slane %v459, %v529
    %v532 = vunpack.c.l.s4 1985246804
    %v533 = vunpack.c.0.s8 %v532
    %v534 = vlaneseq
    %v535 = vshrl.u32 %v534, 7
    %v536 = vsub.s32 %v533, %v535
    %v537 = vrot.slane %v459, %v536
    %v539 = vunpack.c.l.s4 839922192
    %v540 = vunpack.c.0.s8 %v539
    %v541 = vlaneseq
    %v542 = vshrl.u32 %v541, 7
    %v543 = vsub.s32 %v540, %v542
    %v544 = vrot.slane %v466, %v543
    %v546 = vunpack.c.l.s4 1985246804
    %v547 = vunpack.c.0.s8 %v546
    %v548 = vlaneseq
    %v549 = vshrl.u32 %v548, 7
    %v550 = vsub.s32 %v547, %v549
    %v551 = vrot.slane %v466, %v550
    %v553 = vunpack.c.l.s4 839922192
    %v554 = vunpack.c.0.s8 %v553
    %v555 = vlaneseq
    %v556 = vshrl.u32 %v555, 7
    %v557 = vsub.s32 %v554, %v556
    %v558 = vrot.slane %v473, %v557
    %v560 = vunpack.c.l.s4 1985246804
    %v561 = vunpack.c.0.s8 %v560
    %v562 = vlaneseq
    %v563 = vshrl.u32 %v562, 7
    %v564 = vsub.s32 %v561, %v563
    %v565 = vrot.slane %v473, %v564
    %v567 = vunpack.c.l.s4 839922192
    %v568 = vunpack.c.0.s8 %v567
    %v569 = vlaneseq
    %v570 = vshrl.u32 %v569, 7
    %v571 = vsub.s32 %v568, %v570
    %v572 = vrot.slane %v480, %v571
    %v574 = vunpack.c.l.s4 1985246804
    %v575 = vunpack.c.0.s8 %v574
    %v576 = vlaneseq
    %v577 = vshrl.u32 %v576, 7
    %v578 = vsub.s32 %v575, %v577
    %v579 = vrot.slane %v480, %v578
    %v581 = vunpack.c.l.s4 839922192
    %v582 = vunpack.c.0.s8 %v581
    %v583 = vlaneseq
    %v584 = vshrl.u32 %v583, 7
    %v585 = vsub.s32 %v582, %v584
    %v586 = vrot.slane %v487, %v585
    %v588 = vunpack.c.l.s4 1985246804
    %v589 = vunpack.c.0.s8 %v588
    %v590 = vlaneseq
    %v591 = vshrl.u32 %v590, 7
    %v592 = vsub.s32 %v589, %v591
    %v593 = vrot.slane %v487, %v592
    %v595 = vunpack.c.l.s4 839922192
    %v596 = vunpack.c.0.s8 %v595
    %v597 = vlaneseq
    %v598 = vshrl.u32 %v597, 7
    %v599 = vsub.s32 %v596, %v598
    %v600 = vrot.slane %v494, %v599
    %v602 = vunpack.c.l.s4 1985246804
    %v603 = vunpack.c.0.s8 %v602
    %v604 = vlaneseq
    %v605 = vshrl.u32 %v604, 7
    %v606 = vsub.s32 %v603, %v605
    %v607 = vrot.slane %v494, %v606
    %v609 = vunpack.c.l.s4 839922192
    %v610 = vunpack.c.0.s8 %v609
    %v611 = vlaneseq
    %v612 = vshrl.u32 %v611, 7
    %v613 = vsub.s32 %v610, %v612
    %v614 = vrot.slane %v501, %v613
    %v616 = vunpack.c.l.s4 1985246804
    %v617 = vunpack.c.0.s8 %v616
    %v618 = vlaneseq
    %v619 = vshrl.u32 %v618, 7
    %v620 = vsub.s32 %v617, %v619
    %v621 = vrot.slane %v501, %v620
    %v638 = vmul.bf16 %v423, %v516
    %v639 = vmul.bf16 %v424, %v523
    %v640 = vmul.bf16 %v425, %v530
    %v641 = vmul.bf16 %v426, %v537
    %v642 = vmul.bf16 %v427, %v544
    %v643 = vmul.bf16 %v428, %v551
    %v644 = vmul.bf16 %v429, %v558
    %v645 = vmul.bf16 %v430, %v565
    %v646 = vmul.bf16 %v431, %v572
    %v647 = vmul.bf16 %v432, %v579
    %v648 = vmul.bf16 %v433, %v586
    %v649 = vmul.bf16 %v434, %v593
    %v650 = vmul.bf16 %v435, %v600
    %v651 = vmul.bf16 %v436, %v607
    %v652 = vmul.bf16 %v437, %v614
    %v653 = vmul.bf16 %v438, %v621
    %v654 = vld [vmem:[#allocation4] sm:$0xff]
    %v655 = vunpack.c.l.bf16 %v638
    %v656 = vunpack.c.l.bf16 %v639
    %v657 = vunpack.c.l.bf16 %v640
    %v658 = vunpack.c.l.bf16 %v641
    %v659 = vunpack.c.l.bf16 %v642
    %v660 = vunpack.c.l.bf16 %v643
    %v661 = vunpack.c.l.bf16 %v644
    %v662 = vunpack.c.l.bf16 %v645
    %v663 = vunpack.c.l.bf16 %v646
    %v664 = vunpack.c.l.bf16 %v647
    %v665 = vunpack.c.l.bf16 %v648
    %v666 = vunpack.c.l.bf16 %v649
    %v667 = vunpack.c.l.bf16 %v650
    %v668 = vunpack.c.l.bf16 %v651
    %v669 = vunpack.c.l.bf16 %v652
    %v670 = vunpack.c.l.bf16 %v653
    %v671 = vsel %vm316, %v655, 0.0
    %v672 = vsel %vm316, %v656, 0.0
    %v673 = vadd.f32 %v671, %v672
    %v674 = vrot.slane %v673, 4
    %v675 = vadd.f32 %v673, %v674
    %v676 = vrot.slane %v675, 2
    %v677 = vadd.f32 %v675, %v676
    %v678 = vrot.slane %v677, 1
    %v679 = vadd.f32 %v677, %v678
    %v680 = vsel %vm316, %v657, 0.0
    %v681 = vsel %vm316, %v658, 0.0
    %v682 = vadd.f32 %v680, %v681
    %v683 = vrot.slane %v682, 4
    %v684 = vadd.f32 %v682, %v683
    %v685 = vrot.slane %v684, 2
    %v686 = vadd.f32 %v684, %v685
    %v687 = vrot.slane %v686, 1
    %v688 = vadd.f32 %v686, %v687
    %v689 = vsel %vm316, %v659, 0.0
    %v690 = vsel %vm316, %v660, 0.0
    %v691 = vadd.f32 %v689, %v690
    %v692 = vrot.slane %v691, 4
    %v693 = vadd.f32 %v691, %v692
    %v694 = vrot.slane %v693, 2
    %v695 = vadd.f32 %v693, %v694
    %v696 = vrot.slane %v695, 1
    %v697 = vadd.f32 %v695, %v696
    %v698 = vsel %vm316, %v661, 0.0
    %v699 = vsel %vm316, %v662, 0.0
    %v700 = vadd.f32 %v698, %v699
    %v701 = vrot.slane %v700, 4
    %v702 = vadd.f32 %v700, %v701
    %v703 = vrot.slane %v702, 2
    %v704 = vadd.f32 %v702, %v703
    %v705 = vrot.slane %v704, 1
    %v706 = vadd.f32 %v704, %v705
    %v707 = vsel %vm316, %v663, 0.0
    %v708 = vsel %vm316, %v664, 0.0
    %v709 = vadd.f32 %v707, %v708
    %v710 = vrot.slane %v709, 4
    %v711 = vadd.f32 %v709, %v710
    %v712 = vrot.slane %v711, 2
    %v713 = vadd.f32 %v711, %v712
    %v714 = vrot.slane %v713, 1
    %v715 = vadd.f32 %v713, %v714
    %v716 = vsel %vm316, %v665, 0.0
    %v717 = vsel %vm316, %v666, 0.0
    %v718 = vadd.f32 %v716, %v717
    %v719 = vrot.slane %v718, 4
    %v720 = vadd.f32 %v718, %v719
    %v721 = vrot.slane %v720, 2
    %v722 = vadd.f32 %v720, %v721
    %v723 = vrot.slane %v722, 1
    %v724 = vadd.f32 %v722, %v723
    %v725 = vsel %vm316, %v667, 0.0
    %v726 = vsel %vm316, %v668, 0.0
    %v727 = vadd.f32 %v725, %v726
    %v728 = vrot.slane %v727, 4
    %v729 = vadd.f32 %v727, %v728
    %v730 = vrot.slane %v729, 2
    %v731 = vadd.f32 %v729, %v730
    %v732 = vrot.slane %v731, 1
    %v733 = vadd.f32 %v731, %v732
    %v734 = vsel %vm316, %v669, 0.0
    %v735 = vsel %vm316, %v670, 0.0
    %v736 = vadd.f32 %v734, %v735
    %v737 = vrot.slane %v736, 4
    %v738 = vadd.f32 %v736, %v737
    %v739 = vrot.slane %v738, 2
    %v740 = vadd.f32 %v738, %v739
    %v741 = vrot.slane %v740, 1
    %v742 = vadd.f32 %v740, %v741
    %v751 = vsel %vm397, %v688, %v679
    %v752 = vsel %vm399, %v697, %v751
    %v753 = vsel %vm401, %v706, %v752
    %v754 = vsel %vm403, %v715, %v753
    %v755 = vsel %vm405, %v724, %v754
    %v756 = vsel %vm407, %v733, %v755
    %v757 = vsel %vm409, %v742, %v756
    %v759 = vadd.f32 %v654, %v757
    %760 = vst.msk [vmem:[#allocation4] sm:$0xff] %vm316, %v759
    %v761 = vld [vmem:[#allocation5] sm:$0xff]
    %v762 = vsel %vm415, %v422, 0.0
    %763 = vadd.xlane.f32.xlu0 %v762
    %v764 = vpop.xlane.xlu0 %763
    %v765 = vadd.f32 %v761, %v764
    %766 = vst.msk [vmem:[#allocation5] sm:$0xff] %vm420, %v765
    // Predicated region
    $region34: #{tpu_custom_call.1} parent=1 // pred_check
      %p767 = pneg %p57
    $region35: #{tpu_custom_call.1} parent=1 // pred_check_branch
      %769 = sbr.rel (%p767) target = $region37
    $region36: #{tpu_custom_call.1} parent=1 // pred_region
      %v770 = vld [vmem:[#allocation3] sm:$0xff]
      %v771 = vmax.f32 %v770, 1e-09
      %v772 = vrcp.pop %v771
      %v773 = vld [vmem:[#allocation2] sm:$0xff]
      %775 = vset.pattern.permute.xlu0 0
      %776 = vperm.xlu0 %775, %v772
      %v777 = vpop.permute.xlu0 %776
      %v779 = vmul.f32 %v773, %v777
      %v780 = vmul.f32 %v779, %v779
      %v781 = vsel %vm316, %v780, 0.0
      %782 = vadd.xlane.f32.xlu0 %v781
      %v783 = vpop.xlane.xlu0 %782
      %v784 = vmax.f32 %v783, 1e-24
      %v785 = vrsqrt.pop %v784
      %v786 = vmul.f32 %v779, %v785
      %v787 = vld [vmem:[#allocation5] sm:$0xff]
      %v788 = vmax.f32 %v787, 1e-09
      %v789 = vrcp.pop %v788
      %v790 = vld [vmem:[#allocation4] sm:$0xff]
      %792 = vset.pattern.permute.xlu0 0
      %793 = vperm.xlu0 %792, %v789
      %v794 = vpop.permute.xlu0 %793
      %v796 = vmul.f32 %v790, %v794
      %v797 = vmul.f32 %v796, %v796
      %v798 = vsel %vm316, %v797, 0.0
      %799 = vadd.xlane.f32.xlu0 %v798
      %v800 = vpop.xlane.xlu0 %799
      %v801 = vmax.f32 %v800, 1e-24
      %v802 = vrsqrt.pop %v801
      %v803 = vmul.f32 %v796, %v802
      %v804 = vmul.f32 %v786, %v803
      %v805 = vsel %vm316, %v804, 0.0
      %806 = vadd.xlane.f32.xlu0 %v805
      %v807 = vpop.xlane.xlu0 %806
      %v808 = vmax.f32 %v807, 1e-20
      %809 = vst [vmem:[#allocation12] sm:$0xff] %v808
    $region37: #{tpu_custom_call.1} parent=1 // pred_fallthru
      _
    // Predicated region
    $region38: #{tpu_custom_call.1} parent=1 // pred_check
      _
    $region39: #{tpu_custom_call.1} parent=1 // pred_check_branch
      %811 = sbr.rel (0) target = $region41
    $region40: #{tpu_custom_call.1} parent=1 // pred_region
      %s813 = ssub.s32 128, 128
      %814 = vsyncadd [#allocation8], %s813
      %s816 = sshll.u32 [#allocation12], 4
      %s817 = int_to_ptr.vmem [resolvable:$true] %s816
      %819 = dma.vmem_to_hbm [thread:$0]  %s817, 128, %s4, [#allocation8]
    $region41: #{tpu_custom_call.1} parent=1 // pred_fallthru
      _
    // Predicated region
    $region42: #{tpu_custom_call.1} parent=1 // pred_check
      _
    $region43: #{tpu_custom_call.1} parent=1 // pred_check_branch
      %821 = sbr.rel (0) target = $region45
    $region44: #{tpu_custom_call.1} parent=1 // pred_region
      %822 = dma.done [#allocation8], 128
    $region45: #{tpu_custom_call.1} parent=1 // pred_fallthru
      _
    %823 = vsyncpa [#allocation7], 1
    %824 = vsyncpa [#allocation10], 1
    %825 = vsyncpa [#allocation8], 1

</llo_original>
